<compile_context>
chip_gen: v7x
topology: tpu7x:2x2x1
jax: 0.10.0
libtpu: 0.0.40
codegen_flags: <defaults>
</compile_context>

<pallas_src>
import math
from functools import lru_cache
from typing import NamedTuple

import numpy as np
import jax
import jax.numpy as jnp
from jax.experimental import pallas as pl
from jax.experimental.pallas import tpu as pltpu


_MIB = 1024 * 1024


class _ChipCfg(NamedTuple):
    target_block_bytes: int   # per-step streamed block target
    vmem_budget_bytes: int    # resident (double-buffered in + out) budget
    vmem_limit_bytes: int     # scoped limit handed to Mosaic
    multi_core: bool          # >=2 TensorCores per chip (v7x)


@lru_cache(maxsize=1)
def _chip_config() -> _ChipCfg:
    vmem_phys = 64 * _MIB      # conservative default == v7x per-TC VMEM
    multi_core = True          # conservative default: keep >=2 grid points
    try:
        info = pltpu.get_tpu_info()
        vmem_phys = int(getattr(info, "vmem_capacity_bytes", vmem_phys))
        cores = None
        for attr in ("num_cores", "num_tensorcores", "num_tensor_cores",
                     "tensorcore_count", "core_count"):
            val = getattr(info, attr, None)
            if val is not None:
                cores = int(val)
                break
        if cores is not None:
            multi_core = cores >= 2
        else:
            # Heuristic: v7x exposes 64 MiB per TC (2 TCs/chip); v5e/v6e expose
            # 128 MiB with a single TC.
            multi_core = vmem_phys < 96 * _MIB
    except Exception:
        # Hardware query unavailable (interpret mode / old runtime): keep safe defaults.
        pass

    if vmem_phys >= 96 * _MIB:
        # v5e / v6e: 128 MiB physical VMEM.
        return _ChipCfg(12 * _MIB, 80 * _MIB, 100 * _MIB, multi_core)
    # v7x (or unknown): 64 MiB physical per TC.
    return _ChipCfg(7 * _MIB, 44 * _MIB, 56 * _MIB, multi_core)


# ---------------------------------------------------------------------------
# small helpers
# ---------------------------------------------------------------------------

def _round_up(x, m):
    return ((x + m - 1) // m) * m


def _sublane(itemsize):
    # VMEM tile is (8 * packing, 128); packing = 4 / itemsize for sub-32-bit dtypes.
    return 8 * max(1, 4 // max(int(itemsize), 1))


def _vmem_block_bytes(c, hw, itemsize):
    """VMEM footprint of a (*, c, hw) block including (sublane, lane) padding."""
    return _round_up(c, _sublane(itemsize)) * _round_up(hw, 128) * itemsize


def _channel_conv_sigmoid(y, w_ref, C, K):
    """y: (n, C) pooled means with channels on the lane axis.
    Zero-padded K-tap cross-correlation over channels via XLU lane rolls plus
    edge masks, followed by sigmoid.  Returns an (n, C) float32 gate.
    NOTE: relies on pltpu.roll being a logical cyclic shift over length C."""
    pad = (K - 1) // 2
    ch = jax.lax.broadcasted_iota(jnp.int32, y.shape, dimension=1)
    acc = w_ref[pad] * y
    for d in range(1, pad + 1):
        right = pltpu.roll(y, C - d, axis=1)       # right[c] = y[c + d] (cyclic)
        acc = acc + w_ref[pad + d] * jnp.where(ch + d < C, right, 0.0)
        left = pltpu.roll(y, d, axis=1)            # left[c]  = y[c - d] (cyclic)
        acc = acc + w_ref[pad - d] * jnp.where(ch - d >= 0, left, 0.0)
    return jax.nn.sigmoid(acc)


def _pick_batch_tile(B, slab_vmem_bytes, cfg):
    """Batch tile for the fused path: per-step block ~target, 2*in+2*out <= budget.
    No divisibility requirement on B: a padded tail block is handled by clipped
    output writeback (rows are independent)."""
    bt = max(1, min(B, cfg.target_block_bytes // max(slab_vmem_bytes, 1)))
    while bt > 1 and 4 * bt * slab_vmem_bytes > cfg.vmem_budget_bytes:
        bt -= 1
    if cfg.multi_core and B >= 2:
        # keep >=2 grid points so both v7x TensorCores get work
        bt = min(bt, pl.cdiv(B, 2))
    return max(1, min(bt, B))


def _pick_hw_tile(C, HW, itemsize, cfg):
    """Spatial tile for the two-pass path: lane-dense (multiple of 128), balanced so
    the padded tail tile is not almost entirely padding."""
    if HW <= 128:
        return HW
    col_bytes = _round_up(C, _sublane(itemsize)) * itemsize       # per lane column
    t = max(128, min(_round_up(HW, 128),
                     cfg.target_block_bytes // max(col_bytes, 1)))
    t = max(128, (t // 128) * 128)
    while t > 128 and 4 * col_bytes * t > cfg.vmem_budget_bytes:
        t -= 128
    # balance the tiles across the (fixed) number of steps
    n = pl.cdiv(HW, t)
    t = min(_round_up(pl.cdiv(HW, n), 128), _round_up(HW, 128))
    return t


# ---------------------------------------------------------------------------
# fused path: whole (bt, C, HW) slab resident in VMEM
# ---------------------------------------------------------------------------

def _eca_fused_kernel_factory(C, HW, K):
    inv_hw = 1.0 / float(HW)

    def kernel(x_ref, w_ref, o_ref):
        # x_ref / o_ref: (bt, C, HW) in native dtype; w_ref: (K,) f32 in SMEM.
        # Global average pool: lane-axis reduce with f32 accumulation; no full f32
        # copy of the streamed tile is materialized.
        y = jnp.sum(x_ref[...], axis=-1, dtype=jnp.float32) * inv_hw   # (bt, C)
        s = _channel_conv_sigmoid(y, w_ref, C, K)                      # (bt, C) f32
        # Gate cast to the input dtype before the multiply: exact for f32 inputs,
        # within tolerance for bf16, avoids an f32 copy of the whole block in VMEM.
        o_ref[...] = x_ref[...] * s.astype(o_ref.dtype)[:, :, None]

    return kernel


# ---------------------------------------------------------------------------
# two-pass fallback: tiled spatial reduction -> gate, then streamed scale
# (only used when one (C, HW) slab does not fit the VMEM budget)
# ---------------------------------------------------------------------------

def _eca_pool_gate_kernel_factory(C, HW, K, hw_tile):
    inv_hw = 1.0 / float(HW)
    needs_mask = (HW % hw_tile) != 0

    def kernel(x_ref, w_ref, s_ref, acc_ref):
        h = pl.program_id(1)
        nh = pl.num_programs(1)

        @pl.when(h == 0)
        def _init():
            acc_ref[...] = jnp.zeros_like(acc_ref)

        if needs_mask:
            # The mask only matters on the (padded) tail tile; keep the common
            # tiles on the plain-sum path.
            @pl.when(h < nh - 1)
            def _acc_full():
                acc_ref[...] += jnp.sum(x_ref[...], axis=-1, dtype=jnp.float32)

            @pl.when(h == nh - 1)
            def _acc_tail():
                xin = x_ref[...]                                  # (1, C, hw_tile)
                lane = jax.lax.broadcasted_iota(jnp.int32, xin.shape, dimension=2)
                xin = jnp.where(h * hw_tile + lane < HW, xin, jnp.zeros_like(xin))
                acc_ref[...] += jnp.sum(xin, axis=-1, dtype=jnp.float32)
        else:
            acc_ref[...] += jnp.sum(x_ref[...], axis=-1, dtype=jnp.float32)

        @pl.when(h == nh - 1)
        def _finalize():
            y = acc_ref[...] * inv_hw                             # (1, C) pooled means
            s_ref[0] = _channel_conv_sigmoid(y, w_ref, C, K)

    return kernel


def _eca_scale_kernel(s_ref, x_ref, o_ref):
    # s_ref: (1, 1, C) f32 gate; x_ref / o_ref: (1, C, hw_tile) native dtype.
    # NOTE: the padded tail tile reads stale columns of x (garbage * gate); this is
    # safe because Pallas clips the output writeback of the partial block.
    s = s_ref[0, 0]                                               # (C,)
    o_ref[...] = x_ref[...] * s.astype(o_ref.dtype)[None, :, None]


# ---------------------------------------------------------------------------
# wrapper
# ---------------------------------------------------------------------------

def eca_block_pallas(x, conv_weight, *, force_two_pass=False,
                     batch_tile=None, hw_tile=None):
    """x: (B, C, H, W) NCHW (as in PyTorch).  conv_weight: (1, 1, K) as in nn.Conv1d.
    batch_tile / hw_tile are testing overrides for the auto-picked tile sizes."""
    B, C, H, W = x.shape
    HW = H * W
    K = conv_weight.shape[-1]
    itemsize = jnp.dtype(x.dtype).itemsize
    cfg = _chip_config()

    x_flat = x.reshape(B, C, HW)
    w = conv_weight.reshape(K).astype(jnp.float32)                 # 1-D SMEM weight

    # VMEM footprint of one batch element's slab (includes lane/sublane padding).
    slab_vmem = _vmem_block_bytes(C, HW, itemsize)
    fits_fused = (4 * slab_vmem <= cfg.vmem_budget_bytes) and not force_two_pass

    full_cost = pl.CostEstimate(
        flops=int(2 * B * C * HW + 2 * B * C * K),
        transcendentals=int(B * C),
        bytes_accessed=int(2 * B * C * HW * itemsize + 4 * K),
    )

    if fits_fused:
        bt = batch_tile if batch_tile is not None else _pick_batch_tile(B, slab_vmem, cfg)
        bt = max(1, min(bt, B))
        grid_b = pl.cdiv(B, bt)
        out_flat = pl.pallas_call(
            _eca_fused_kernel_factory(C, HW, K),
            out_shape=jax.ShapeDtypeStruct((B, C, HW), x.dtype),
            grid=(grid_b,),
            in_specs=[
                pl.BlockSpec((bt, C, HW), lambda b: (b, 0, 0)),
                pl.BlockSpec(memory_space=pltpu.MemorySpace.SMEM),
            ],
            out_specs=pl.BlockSpec((bt, C, HW), lambda b: (b, 0, 0)),
            compiler_params=pltpu.CompilerParams(
                dimension_semantics=("parallel",),
                vmem_limit_bytes=cfg.vmem_limit_bytes),
            cost_estimate=full_cost,
        )(x_flat, w)
        return out_flat.reshape(B, C, H, W)

    # ---- two-pass fallback for feature maps whose (C, HW) slab exceeds VMEM ----
    ht = hw_tile if hw_tile is not None else _pick_hw_tile(C, HW, itemsize, cfg)
    n_hw = pl.cdiv(HW, ht)

    pool_cost = pl.CostEstimate(
        flops=int(B * C * HW + 2 * B * C * K),
        transcendentals=int(B * C),
        bytes_accessed=int(B * C * HW * itemsize + 4 * B * C + 4 * K),
    )
    s = pl.pallas_call(
        _eca_pool_gate_kernel_factory(C, HW, K, ht),
        out_shape=jax.ShapeDtypeStruct((B, 1, C), jnp.float32),
        grid=(B, n_hw),
        in_specs=[
            pl.BlockSpec((1, C, ht), lambda b, h: (b, 0, h)),
            pl.BlockSpec(memory_space=pltpu.MemorySpace.SMEM),
        ],
        out_specs=pl.BlockSpec((1, 1, C), lambda b, h: (b, 0, 0)),
        scratch_shapes=[pltpu.VMEM((1, C), jnp.float32)],
        compiler_params=pltpu.CompilerParams(
            dimension_semantics=("parallel", "arbitrary"),
            vmem_limit_bytes=cfg.vmem_limit_bytes),
        cost_estimate=pool_cost,
    )(x_flat, w)

    out_flat = pl.pallas_call(
        _eca_scale_kernel,
        out_shape=jax.ShapeDtypeStruct((B, C, HW), x.dtype),
        grid=(B, n_hw),
        in_specs=[
            pl.BlockSpec((1, 1, C), lambda b, h: (b, 0, 0)),
            pl.BlockSpec((1, C, ht), lambda b, h: (b, 0, h)),
        ],
        out_specs=pl.BlockSpec((1, C, ht), lambda b, h: (b, 0, h)),
        compiler_params=pltpu.CompilerParams(
            dimension_semantics=("parallel", "parallel"),
            vmem_limit_bytes=cfg.vmem_limit_bytes),
        cost_estimate=full_cost,
    )(s, x_flat)
    return out_flat.reshape(B, C, H, W)


# ---------------------------------------------------------------------------
# pure-JAX reference mirroring the PyTorch forward
# ---------------------------------------------------------------------------

def eca_block_reference(x, conv_weight):
    B, C, H, W = x.shape
    K = conv_weight.shape[-1]
    pad = (K - 1) // 2
    y = jnp.mean(x.astype(jnp.float32), axis=(2, 3))              # (B, C)
    yp = jnp.pad(y, ((0, 0), (pad, pad)))
    w = conv_weight.reshape(K).astype(jnp.float32)
    conv = sum(w[j] * yp[:, j:j + C] for j in range(K))            # (B, C)
    s = jax.nn.sigmoid(conv)
    return (x * s[:, :, None, None]).astype(x.dtype)


if __name__ == "__main__":
    # Module hyper-params: channel=64 -> kernel_size = int(abs((log2(64)+1)/2)) = 3 (odd)
    B, C, H, W = 2, 64, 16, 16
    b_hyper, gamma = 1, 2
    kernel_size = int(abs((math.log(C, 2) + b_hyper) / gamma))
    kernel_size = kernel_size if kernel_size % 2 else kernel_size + 1

    key = jax.random.PRNGKey(0)
    kx, kw, kx2, kx3 = jax.random.split(key, 4)
    x = jax.random.normal(kx, (B, C, H, W), dtype=jnp.float32)
    # Deterministic Conv1d weight (shape (out=1, in=1, k)), uniform like PyTorch default.
    bound = 1.0 / math.sqrt(kernel_size)
    conv_weight = jax.random.uniform(
        kw, (1, 1, kernel_size), dtype=jnp.float32, minval=-bound, maxval=bound)

    # 1) fused (single-pass) path.
    out = jax.block_until_ready(eca_block_pallas(x, conv_weight))
    ref = eca_block_reference(x, conv_weight)
    np.testing.assert_allclose(np.asarray(out), np.asarray(ref), rtol=1e-5, atol=1e-5)

    # 2) fused path with a padded tail batch block (B=3, bt=2) — exercises the
    #    relaxed divisibility rule / clipped writeback.
    x3 = jax.random.normal(kx3, (3, C, H, W), dtype=jnp.float32)
    out3 = jax.block_until_ready(eca_block_pallas(x3, conv_weight, batch_tile=2))
    ref3 = eca_block_reference(x3, conv_weight)
    np.testing.assert_allclose(np.asarray(out3), np.asarray(ref3), rtol=1e-5, atol=1e-5)

    # 3) two-pass (tiled-HW) fallback on a non-multiple-of-128 spatial size with a
    #    forced small hw tile so both the multi-tile accumulation and the masked
    #    tail tile are covered.
    x2 = jax.random.normal(kx2, (B, C, 20, 20), dtype=jnp.float32)
    out2 = jax.block_until_ready(
        eca_block_pallas(x2, conv_weight, force_two_pass=True, hw_tile=128))
    ref2 = eca_block_reference(x2, conv_weight)
    np.testing.assert_allclose(np.asarray(out2), np.asarray(ref2), rtol=1e-5, atol=1e-5)

    print("KERNEL_OK")
</pallas_src>

<mosaic_0001>
module attributes {stable_mosaic.version = 11 : i64} {
  func.func @kernel(%arg0: i32, %arg1: memref<1x64x256xf32, #tpu.memory_space<vmem>>, %arg2: memref<3xf32, #tpu.memory_space<smem>>, %arg3: memref<1x64x256xf32, #tpu.memory_space<vmem>>) attributes {dimension_semantics = [#tpu.dimension_semantics<parallel>], iteration_bounds = array<i64: 2>, scalar_prefetch = 0 : i64, scratch_operands = 0 : i64, tpu.core_type = #tpu.core_type<tc>, window_params = [{transform_indices = @transform_0, window_bounds = array<i64: 1, 64, 256>}, {transform_indices = @transform_1, window_bounds = array<i64: 3>}, {transform_indices = @transform_2, window_bounds = array<i64: 1, 64, 256>}]} {
    %c0 = arith.constant 0 : index
    %c0_0 = arith.constant 0 : index
    %c0_1 = arith.constant 0 : index
    %0 = vector.load %arg1[%c0, %c0_0, %c0_1] : memref<1x64x256xf32, #tpu.memory_space<vmem>>, vector<1x64x256xf32>
    %cst = arith.constant dense<0.000000e+00> : vector<1x64xf32>
    %1 = vector.multi_reduction <add>, %0, %cst [2] : vector<1x64x256xf32> to vector<1x64xf32>
    %cst_2 = arith.constant 3.906250e-03 : f32
    %2 = vector.broadcast %cst_2 : f32 to vector<1x64xf32>
    %3 = arith.mulf %1, %2 : vector<1x64xf32>
    %4 = tpu.iota {dimensions = array<i32: 1>} : vector<1x64xi32>
    %c1 = arith.constant 1 : index
    %5 = memref.load %arg2[%c1] : memref<3xf32, #tpu.memory_space<smem>>
    %6 = vector.broadcast %5 : f32 to vector<1x64xf32>
    %7 = arith.mulf %6, %3 : vector<1x64xf32>
    %c63_i32 = arith.constant 63 : i32
    %8 = tpu.dynamic_rotate %3 by %c63_i32 dim 1 : vector<1x64xf32>, i32 -> vector<1x64xf32>
    %c2 = arith.constant 2 : index
    %9 = memref.load %arg2[%c2] : memref<3xf32, #tpu.memory_space<smem>>
    %c1_i32 = arith.constant 1 : i32
    %10 = vector.broadcast %c1_i32 : i32 to vector<1x64xi32>
    %11 = arith.addi %4, %10 : vector<1x64xi32>
    %c64_i32 = arith.constant 64 : i32
    %12 = vector.broadcast %c64_i32 : i32 to vector<1x64xi32>
    %13 = arith.cmpi slt, %11, %12 : vector<1x64xi32>
    %cst_3 = arith.constant 0.000000e+00 : f32
    %14 = vector.broadcast %cst_3 : f32 to vector<1x64xf32>
    %15 = arith.select %13, %8, %14 : vector<1x64xi1>, vector<1x64xf32>
    %16 = vector.broadcast %9 : f32 to vector<1x64xf32>
    %17 = arith.mulf %16, %15 : vector<1x64xf32>
    %18 = arith.addf %7, %17 : vector<1x64xf32>
    %c1_i32_4 = arith.constant 1 : i32
    %19 = tpu.dynamic_rotate %3 by %c1_i32_4 dim 1 : vector<1x64xf32>, i32 -> vector<1x64xf32>
    %c0_5 = arith.constant 0 : index
    %20 = memref.load %arg2[%c0_5] : memref<3xf32, #tpu.memory_space<smem>>
    %c1_i32_6 = arith.constant 1 : i32
    %21 = vector.broadcast %c1_i32_6 : i32 to vector<1x64xi32>
    %22 = arith.subi %4, %21 : vector<1x64xi32>
    %c0_i32 = arith.constant 0 : i32
    %23 = vector.broadcast %c0_i32 : i32 to vector<1x64xi32>
    %24 = arith.cmpi sge, %22, %23 : vector<1x64xi32>
    %cst_7 = arith.constant 0.000000e+00 : f32
    %25 = vector.broadcast %cst_7 : f32 to vector<1x64xf32>
    %26 = arith.select %24, %19, %25 : vector<1x64xi1>, vector<1x64xf32>
    %27 = vector.broadcast %20 : f32 to vector<1x64xf32>
    %28 = arith.mulf %27, %26 : vector<1x64xf32>
    %29 = arith.addf %18, %28 : vector<1x64xf32>
    %30 = arith.negf %29 : vector<1x64xf32>
    %31 = math.exp %30 : vector<1x64xf32>
    %cst_8 = arith.constant 1.000000e+00 : f32
    %32 = vector.broadcast %cst_8 : f32 to vector<1x64xf32>
    %33 = arith.addf %32, %31 : vector<1x64xf32>
    %34 = arith.divf %32, %33 : vector<1x64xf32>
    %c0_9 = arith.constant 0 : index
    %c0_10 = arith.constant 0 : index
    %c0_11 = arith.constant 0 : index
    %35 = vector.load %arg1[%c0_9, %c0_10, %c0_11] : memref<1x64x256xf32, #tpu.memory_space<vmem>>, vector<1x64x256xf32>
    %36 = vector.shape_cast %34 : vector<1x64xf32> to vector<1x64x1xf32>
    %37 = vector.broadcast %36 : vector<1x64x1xf32> to vector<1x64x256xf32>
    %38 = arith.mulf %35, %37 : vector<1x64x256xf32>
    %c0_12 = arith.constant 0 : index
    %c0_13 = arith.constant 0 : index
    %c0_14 = arith.constant 0 : index
    %39 = vector.load %arg3[%c0_12, %c0_13, %c0_14] : memref<1x64x256xf32, #tpu.memory_space<vmem>>, vector<1x64x256xf32>
    tpu.vector_store %arg3[%c0_12, %c0_13, %c0_14], %38 {strides = array<i32>} : memref<1x64x256xf32, #tpu.memory_space<vmem>>, vector<1x64x256xf32>,
    return
  }
  func.func @transform_0(%arg0: i32) -> (i32, i32, i32) {
    %c0_i32 = arith.constant 0 : i32
    %c0_i32_0 = arith.constant 0 : i32
    %c0_i32_1 = arith.constant 0 : i32
    return %arg0, %c0_i32, %c0_i32_0 : i32, i32, i32
  }
  func.func @transform_1(%arg0: i32) -> i32 {
    %c0_i32 = arith.constant 0 : i32
    %c0_i32_0 = arith.constant 0 : i32
    return %c0_i32 : i32
  }
  func.func @transform_2(%arg0: i32) -> (i32, i32, i32) {
    %c0_i32 = arith.constant 0 : i32
    %c0_i32_0 = arith.constant 0 : i32
    %c0_i32_1 = arith.constant 0 : i32
    return %arg0, %c0_i32, %c0_i32_0 : i32, i32, i32
  }
}

</mosaic_0001>

<llo_original>
// kernel: tpu_custom_call.1
$region0: #{tpu_custom_call.1}
  #allocation0 [shape = 'u32[]', space=smem, size = 0x4, offset = 0x4, fixed_abs, tag = 'smem constant byte address 0x4 - core index']
  #allocation1 [shape = 'u32[144,128]{1,0:T(1,128)}', space=vmem, size = 0x12000, scoped, tag = 'internal scratch']
  %s0 = inlined_call_operand.hbm [shape: f32[2,64,256], index: 0, kind: input, shape index: {}]
  %s1 = inlined_call_operand.vmem [shape: f32[3], index: 1, kind: input, shape index: {}]
  %s2 = inlined_call_operand.hbm [shape: f32[2,64,256], index: 2, kind: output, shape index: {}]
  %s3 = sld [smem:[#allocation0]]
  $region49: #{tpu_custom_call.1} parent=0
    _
  %s5 = ssub.s32 1, %s3
  %s6 = scalar_select 0, %s5, %s3
  $region1: #{tpu_custom_call.1} parent=0
    #allocation2 [shape = 'u8[131072]{0}', space=vmem, size = 0x20000, scoped, tag = 'input window, operand 0']
    #allocation3 [shape = 's32[2]{0}', space=sflag, size = 0x8, scoped, tag = 'scoped memory for tpu_custom_call.1']
    #allocation4 [shape = 's32[2]{0}', space=sflag, size = 0x8, scoped, tag = 'scoped memory for tpu_custom_call.1']
    #allocation5 [shape = 's32[2]{0}', space=sflag, size = 0x8, scoped, tag = 'scoped memory for tpu_custom_call.1']
    #allocation6 [shape = 'u8[512]{0}', space=smem, size = 0x200, scoped, tag = 'input window, operand 1, single buffered']
    #allocation7 [shape = 'u8[131072]{0}', space=vmem, size = 0x20000, scoped, tag = 'output window, operand 0']
    %7 = vsyncpa [#allocation3], 0
    %s8 = scalar_lea.sflag [#allocation3], 1
    %9 = vsyncpa %s8, 0
    %10 = vsyncpa [#allocation5], 0
    %11 = vsyncpa [#allocation4], 0
    %s12 = scalar_lea.sflag [#allocation4], 1
    %13 = vsyncpa %s12, 0
    loop: start=0, step=1, limit=4
    $region2: #{tpu_custom_call.1} parent=1 // loop_pre_header
      _
    $region3: #{tpu_custom_call.1} parent=1 // loop_header
      %s15 = sphi 0, %s19
      %p16 = scmp.ge.s32.totalorder %s15, 4
      %s25 = sphi 0, %s27
      %s28 = sphi 0, %s25
      %s29 = sphi 0, %s28
      %s45 = sphi 0, %s29
      %s49 = sphi 0, %s49
      %s51 = sphi 0, %s49
      %s52 = sphi 0, %s51
      %s66 = sphi 0, %s52
      %s72 = sphi 0, %s74
      %s75 = sphi 0, %s72
      %s76 = sphi 0, %s75
      %s92 = sphi 0, %s76
    $region4: #{tpu_custom_call.1} parent=1 // loop_header_branch
      %18 = sbr.rel (%p16) target = $region8
    $region5: #{tpu_custom_call.1} parent=1 // loop_body
      %s20 = ssub.s32 %s15, 1
      %s21 = ssub.s32 %s15, 2
      %s22 = sadd.s32 %s15, 1
      %s23 = ssub.s32 %s15, %s22
      %p24 = scmp.eq.s32.totalorder %s23, 0
      %s26 = sadd.s32 %s25, 1
      %s27 = scalar_select %p24, %s25, %s26
      %p30 = pneg %p24
      %p31 = scmp.eq.s32.totalorder %s15, 1
      %p32 = por %p30, %p31
      %p33 = scmp.ne.s32.totalorder %s25, %s28
      %p34 = scmp.eq.s32.totalorder %s15, 0
      %p35 = por %p33, %p34
      %p36 = scmp.ne.s32.totalorder %s25, %s28
      %p37 = scmp.eq.s32.totalorder %s20, 1
      %p38 = por %p36, %p37
      %p39 = scmp.ne.s32.totalorder %s28, %s29
      %p40 = scmp.eq.s32.totalorder %s20, 0
      %p41 = por %p39, %p40
      %p42 = scmp.ne.s32.totalorder %s28, %s29
      %p43 = scmp.eq.s32.totalorder %s21, 1
      %p44 = por %p42, %p43
      %p46 = scmp.ne.s32.totalorder %s29, %s45
      %p47 = scmp.eq.s32.totalorder %s21, 0
      %p48 = por %p46, %p47
      %s50 = sadd.s32 %s49, 1
      %p53 = scmp.eq.s32.totalorder %s15, 1
      %p54 = scmp.ne.s32.totalorder %s49, %s51
      %p55 = scmp.eq.s32.totalorder %s15, 0
      %p56 = por %p54, %p55
      %p57 = scmp.ne.s32.totalorder %s49, %s51
      %p58 = scmp.eq.s32.totalorder %s20, 1
      %p59 = por %p57, %p58
      %p60 = scmp.ne.s32.totalorder %s51, %s52
      %p61 = scmp.eq.s32.totalorder %s20, 0
      %p62 = por %p60, %p61
      %p63 = scmp.ne.s32.totalorder %s51, %s52
      %p64 = scmp.eq.s32.totalorder %s21, 1
      %p65 = por %p63, %p64
      %p67 = scmp.ne.s32.totalorder %s52, %s66
      %p68 = scmp.eq.s32.totalorder %s21, 0
      %p69 = por %p67, %p68
      %s70 = ssub.s32 %s15, %s22
      %p71 = scmp.eq.s32.totalorder %s70, 0
      %s73 = sadd.s32 %s72, 1
      %s74 = scalar_select %p71, %s72, %s73
      %p77 = pneg %p71
      %p78 = scmp.eq.s32.totalorder %s15, 1
      %p79 = por %p77, %p78
      %p80 = scmp.ne.s32.totalorder %s72, %s75
      %p81 = scmp.eq.s32.totalorder %s15, 0
      %p82 = por %p80, %p81
      %p83 = scmp.ne.s32.totalorder %s72, %s75
      %p84 = scmp.eq.s32.totalorder %s20, 1
      %p85 = por %p83, %p84
      %p86 = scmp.ne.s32.totalorder %s75, %s76
      %p87 = scmp.eq.s32.totalorder %s20, 0
      %p88 = por %p86, %p87
      %p89 = scmp.ne.s32.totalorder %s75, %s76
      %p90 = scmp.eq.s32.totalorder %s21, 1
      %p91 = por %p89, %p90
      %p93 = scmp.ne.s32.totalorder %s76, %s92
      %p94 = scmp.eq.s32.totalorder %s21, 0
      %p95 = por %p93, %p94
      %p96 = scmp.le.s32.totalorder 1, %s15
      %p97 = scmp.lt.s32.totalorder %s15, 3
      %p98 = pnand %p96, %p97
      %p99 = pneg %p98
      // Predicated region
      $region9: #{tpu_custom_call.1} parent=5 // pred_check
        _
      $region10: #{tpu_custom_call.1} parent=5 // pred_check_branch
        %101 = sbr.rel (%p98) target = $region12
      $region11: #{tpu_custom_call.1} parent=5 // pred_region
        %s102 = ssub.s32 %s15, 1
        // Predicated region
        $region13: #{tpu_custom_call.1} parent=11 // pred_check
          %p103 = pneg %p62
        $region14: #{tpu_custom_call.1} parent=11 // pred_check_branch
          %105 = sbr.rel (%p103) target = $region16
        $region15: #{tpu_custom_call.1} parent=11 // pred_region
          %s107 = ssub.s32 16, 16
          %108 = vsyncadd [#allocation5], %s107
          %s110 = sshll.u32 %s1, 4
          %s111 = int_to_ptr.vmem [resolvable:$true] %s110
          %113 = dma.vmem_to_smem %s111, 16, [#allocation6], [#allocation5]
        $region16: #{tpu_custom_call.1} parent=11 // pred_fallthru
          _
      $region12: #{tpu_custom_call.1} parent=5 // pred_fallthru
        _
      %p114 = scmp.lt.s32.totalorder %s15, 2
      // Predicated region
      $region17: #{tpu_custom_call.1} parent=5 // pred_check
        %p115 = pneg %p114
      $region18: #{tpu_custom_call.1} parent=5 // pred_check_branch
        %117 = sbr.rel (%p115) target = $region20
      $region19: #{tpu_custom_call.1} parent=5 // pred_region
        // Predicated region
        $region21: #{tpu_custom_call.1} parent=19 // pred_check
          %p118 = pneg %p35
        $region22: #{tpu_custom_call.1} parent=19 // pred_check_branch
          %120 = sbr.rel (%p118) target = $region24
        $region23: #{tpu_custom_call.1} parent=19 // pred_region
          %s121 = sand.u32 %s25, 1
          %s122 = scalar_lea.sflag [#allocation3], %s121
          %s123 = sand.u32 %s25, 1
          %s124 = smul.addr %s123, 128
          %s125 = scalar_lea.vmem [#allocation2], %s124
          %s127 = ssub.s32 2048, 2048
          %128 = vsyncadd %s122, %s127
          %s129 = smul.addr %s15, 16
          %s130 = smul.addr %s129, 128
          %s131 = scalar_lea.hbm %s0, %s130
          %s132 = sshll.u32 %s125, 4
          %s133 = int_to_ptr.vmem [resolvable:$true] %s132
          %138 = dma.hbm_to_vmem [thread:$0]  %s131, 2048, %s133, %s122, 256, 256, 16
        $region24: #{tpu_custom_call.1} parent=19 // pred_fallthru
          _
      $region20: #{tpu_custom_call.1} parent=5 // pred_fallthru
        _
      %p139 = scmp.le.s32.totalorder 1, %s15
      %p140 = scmp.lt.s32.totalorder %s15, 3
      %p141 = pnand %p139, %p140
      %p142 = pneg %p141
      // Predicated region
      $region25: #{tpu_custom_call.1} parent=5 // pred_check
        _
      $region26: #{tpu_custom_call.1} parent=5 // pred_check_branch
        %144 = sbr.rel (%p141) target = $region28
      $region27: #{tpu_custom_call.1} parent=5 // pred_region
        %s145 = ssub.s32 %s15, 1
        %s146 = sand.u32 %s28, 1
        %s147 = scalar_lea.sflag [#allocation3], %s146
        %s148 = sand.u32 %s28, 1
        %s149 = smul.addr %s148, 128
        %s150 = scalar_lea.vmem [#allocation2], %s149
        // Predicated region
        $region29: #{tpu_custom_call.1} parent=27 // pred_check
          %p151 = pneg %p41
        $region30: #{tpu_custom_call.1} parent=27 // pred_check_branch
          %153 = sbr.rel (%p151) target = $region32
        $region31: #{tpu_custom_call.1} parent=27 // pred_region
          %154 = dma.done %s147, 2048
        $region32: #{tpu_custom_call.1} parent=27 // pred_fallthru
          _
        // Predicated region
        $region33: #{tpu_custom_call.1} parent=27 // pred_check
          %p155 = pneg %p62
        $region34: #{tpu_custom_call.1} parent=27 // pred_check_branch
          %157 = sbr.rel (%p155) target = $region36
        $region35: #{tpu_custom_call.1} parent=27 // pred_region
          %158 = dma.done [#allocation5], 16
        $region36: #{tpu_custom_call.1} parent=27 // pred_fallthru
          _
        %159 = sfence
        %s160 = sand.u32 %s28, 1
        %s161 = scalar_lea.sflag [#allocation3], %s160
        %s162 = sand.u32 %s28, 1
        %s163 = smul.addr %s162, 128
        %s164 = scalar_lea.vmem [#allocation2], %s163
        %p165 = pneg %p41
        %p166 = pneg %p38
        %p167 = pneg %p62
        %p168 = pneg %p59
        %p169 = pneg %p88
        %p170 = pneg %p85
        %s171 = sand.u32 %s75, 1
        %s172 = scalar_lea.sflag [#allocation4], %s171
        %s173 = sand.u32 %s75, 1
        %s174 = smul.addr %s173, 128
        %s175 = scalar_lea.vmem [#allocation7], %s174
        %v176 = vld [vmem:[%s150] sm:$0xff]
        %v177 = vld [vmem:[%s150 + $0x8] sm:$0xff]
        %v178 = vld [vmem:[%s150 + $0x10] sm:$0xff]
        %v179 = vld [vmem:[%s150 + $0x18] sm:$0xff]
        %v180 = vld [vmem:[%s150 + $0x20] sm:$0xff]
        %v181 = vld [vmem:[%s150 + $0x28] sm:$0xff]
        %v182 = vld [vmem:[%s150 + $0x30] sm:$0xff]
        %v183 = vld [vmem:[%s150 + $0x38] sm:$0xff]
        %v184 = vld [vmem:[%s150 + $0x40] sm:$0xff]
        %v185 = vld [vmem:[%s150 + $0x48] sm:$0xff]
        %v186 = vld [vmem:[%s150 + $0x50] sm:$0xff]
        %v187 = vld [vmem:[%s150 + $0x58] sm:$0xff]
        %v188 = vld [vmem:[%s150 + $0x60] sm:$0xff]
        %v189 = vld [vmem:[%s150 + $0x68] sm:$0xff]
        %v190 = vld [vmem:[%s150 + $0x70] sm:$0xff]
        %v191 = vld [vmem:[%s150 + $0x78] sm:$0xff]
        %v192 = vadd.f32 %v176, %v177
        %193 = vadd.xlane.f32.xlu0 %v192
        %v194 = vpop.xlane.xlu0 %193
        %v195 = vadd.f32 %v178, %v179
        %196 = vadd.xlane.f32.xlu0 %v195
        %v197 = vpop.xlane.xlu0 %196
        %v198 = vadd.f32 %v180, %v181
        %199 = vadd.xlane.f32.xlu0 %v198
        %v200 = vpop.xlane.xlu0 %199
        %v201 = vadd.f32 %v182, %v183
        %202 = vadd.xlane.f32.xlu0 %v201
        %v203 = vpop.xlane.xlu0 %202
        %v204 = vadd.f32 %v184, %v185
        %205 = vadd.xlane.f32.xlu0 %v204
        %v206 = vpop.xlane.xlu0 %205
        %v207 = vadd.f32 %v186, %v187
        %208 = vadd.xlane.f32.xlu0 %v207
        %v209 = vpop.xlane.xlu0 %208
        %v210 = vadd.f32 %v188, %v189
        %211 = vadd.xlane.f32.xlu0 %v210
        %v212 = vpop.xlane.xlu0 %211
        %v213 = vadd.f32 %v190, %v191
        %214 = vadd.xlane.f32.xlu0 %v213
        %v215 = vpop.xlane.xlu0 %214
        %v216 = vmul.f32 %v194, 0.00390625
        %v217 = vmul.f32 %v197, 0.00390625
        %v218 = vmul.f32 %v200, 0.00390625
        %v219 = vmul.f32 %v203, 0.00390625
        %v220 = vmul.f32 %v206, 0.00390625
        %v221 = vmul.f32 %v209, 0.00390625
        %v222 = vmul.f32 %v212, 0.00390625
        %v223 = vmul.f32 %v215, 0.00390625
        %v224 = vlaneseq
        %v225 = vand.u32 %v224, 127
        %s226 = sld [smem:[#allocation6 + $0x1]]
        %v227 = vstv %s226
        %v228 = vmul.f32 %v227, %v216
        %v229 = vmul.f32 %v227, %v217
        %v230 = vmul.f32 %v227, %v218
        %v231 = vmul.f32 %v227, %v219
        %v232 = vmul.f32 %v227, %v220
        %v233 = vmul.f32 %v227, %v221
        %v234 = vmul.f32 %v227, %v222
        %v235 = vmul.f32 %v227, %v223
        %v244 = vlaneseq
        %v245 = vshrl.u32 %v244, 7
        %v246 = vsub.s32 %v225, %v245
        %v247 = vrot.slane %v216, %v246
        %v248 = vadd.s32 %v225, 4294967288
        %v249 = vlaneseq
        %v250 = vshrl.u32 %v249, 7
        %v251 = vsub.s32 %v248, %v250
        %v252 = vrot.slane %v217, %v251
        %vm253 = vcmask 130112
        %v254 = vsel %vm253, %v252, %v247
        %v255 = vadd.s32 %v225, 4294967280
        %v256 = vlaneseq
        %v257 = vshrl.u32 %v256, 7
        %v258 = vsub.s32 %v255, %v257
        %v259 = vrot.slane %v218, %v258
        %vm260 = vcmask 195712
        %v261 = vsel %vm260, %v259, %v254
        %v262 = vadd.s32 %v225, 4294967272
        %v263 = vlaneseq
        %v264 = vshrl.u32 %v263, 7
        %v265 = vsub.s32 %v262, %v264
        %v266 = vrot.slane %v219, %v265
        %vm267 = vcmask 261312
        %v268 = vsel %vm267, %v266, %v261
        %v269 = vadd.s32 %v225, 4294967264
        %v270 = vlaneseq
        %v271 = vshrl.u32 %v270, 7
        %v272 = vsub.s32 %v269, %v271
        %v273 = vrot.slane %v220, %v272
        %vm274 = vcmask 326912
        %v275 = vsel %vm274, %v273, %v268
        %v276 = vadd.s32 %v225, 4294967256
        %v277 = vlaneseq
        %v278 = vshrl.u32 %v277, 7
        %v279 = vsub.s32 %v276, %v278
        %v280 = vrot.slane %v221, %v279
        %vm281 = vcmask 392512
        %v282 = vsel %vm281, %v280, %v275
        %v283 = vadd.s32 %v225, 4294967248
        %v284 = vlaneseq
        %v285 = vshrl.u32 %v284, 7
        %v286 = vsub.s32 %v283, %v285
        %v287 = vrot.slane %v222, %v286
        %vm288 = vcmask 458112
        %v289 = vsel %vm288, %v287, %v282
        %v290 = vadd.s32 %v225, 4294967240
        %v291 = vlaneseq
        %v292 = vshrl.u32 %v291, 7
        %v293 = vsub.s32 %v290, %v292
        %v294 = vrot.slane %v223, %v293
        %vm295 = vcmask 523712
        %v296 = vsel %vm295, %v294, %v289
        %vm298 = vcmask 1048064
        %299 = vrot.lane.b32.xlu0 %v296, 64
        %v300 = vpop.permute.xlu0 %299
        %v301 = vsel %vm298, %v300, %v296
        %302 = vrot.lane.b32.xlu0 %v301, 64
        %v303 = vpop.permute.xlu0 %302
        %v304 = vsel %vm298, %v303, %v296
        %s305 = sld [smem:[#allocation6 + $0x2]]
        %v306 = vadd.s32 %v225, 1
        %vm307 = vcmp.lt.s32.totalorder %v306, 64
        %309 = vrot.lane.b32.xlu0 %v304, 127
        %v310 = vpop.permute.xlu0 %309
        %v312 = vsel %vm307, %v310, 0.0
        %v313 = vstv %s305
        %v314 = vmul.f32 %v313, %v312
        %v316 = vlaneseq
        %v317 = vshrl.u32 %v316, 7
        %v318 = vsub.s32 0, %v317
        %v319 = vrot.slane %v314, %v318
        %321 = vbcast.lane.b32.xlu0 %v319, 256
        %v322 = vpop.permute.xlu0 %321
        %s324 = sor.u32 256, 8
        %325 = vbcast.lane.b32.xlu0 %v319, %s324
        %v326 = vpop.permute.xlu0 %325
        %s328 = sor.u32 256, 16
        %329 = vbcast.lane.b32.xlu0 %v319, %s328
        %v330 = vpop.permute.xlu0 %329
        %s332 = sor.u32 256, 24
        %333 = vbcast.lane.b32.xlu0 %v319, %s332
        %v334 = vpop.permute.xlu0 %333
        %s336 = sor.u32 256, 32
        %337 = vbcast.lane.b32.xlu0 %v319, %s336
        %v338 = vpop.permute.xlu0 %337
        %s340 = sor.u32 256, 40
        %341 = vbcast.lane.b32.xlu0 %v319, %s340
        %v342 = vpop.permute.xlu0 %341
        %s344 = sor.u32 256, 48
        %345 = vbcast.lane.b32.xlu0 %v319, %s344
        %v346 = vpop.permute.xlu0 %345
        %s348 = sor.u32 256, 56
        %349 = vbcast.lane.b32.xlu0 %v319, %s348
        %v350 = vpop.permute.xlu0 %349
        %v359 = vadd.f32 %v228, %v322
        %v360 = vadd.f32 %v229, %v326
        %v361 = vadd.f32 %v230, %v330
        %v362 = vadd.f32 %v231, %v334
        %v363 = vadd.f32 %v232, %v338
        %v364 = vadd.f32 %v233, %v342
        %v365 = vadd.f32 %v234, %v346
        %v366 = vadd.f32 %v235, %v350
        %s367 = sld [smem:[#allocation6]]
        %v368 = vsub.s32 %v225, 1
        %vm369 = vcmp.ge.s32.totalorder %v368, 0
        %370 = vrot.lane.b32.xlu0 %v304, 65
        %v371 = vpop.permute.xlu0 %370
        %v373 = vsel %vm369, %v371, 0.0
        %v374 = vstv %s367
        %v375 = vmul.f32 %v374, %v373
        %v377 = vlaneseq
        %v378 = vshrl.u32 %v377, 7
        %v379 = vsub.s32 0, %v378
        %v380 = vrot.slane %v375, %v379
        %382 = vbcast.lane.b32.xlu0 %v380, 256
        %v383 = vpop.permute.xlu0 %382
        %s385 = sor.u32 256, 8
        %386 = vbcast.lane.b32.xlu0 %v380, %s385
        %v387 = vpop.permute.xlu0 %386
        %s389 = sor.u32 256, 16
        %390 = vbcast.lane.b32.xlu0 %v380, %s389
        %v391 = vpop.permute.xlu0 %390
        %s393 = sor.u32 256, 24
        %394 = vbcast.lane.b32.xlu0 %v380, %s393
        %v395 = vpop.permute.xlu0 %394
        %s397 = sor.u32 256, 32
        %398 = vbcast.lane.b32.xlu0 %v380, %s397
        %v399 = vpop.permute.xlu0 %398
        %s401 = sor.u32 256, 40
        %402 = vbcast.lane.b32.xlu0 %v380, %s401
        %v403 = vpop.permute.xlu0 %402
        %s405 = sor.u32 256, 48
        %406 = vbcast.lane.b32.xlu0 %v380, %s405
        %v407 = vpop.permute.xlu0 %406
        %s409 = sor.u32 256, 56
        %410 = vbcast.lane.b32.xlu0 %v380, %s409
        %v411 = vpop.permute.xlu0 %410
        %v420 = vadd.f32 %v359, %v383
        %v421 = vadd.f32 %v360, %v387
        %v422 = vadd.f32 %v361, %v391
        %v423 = vadd.f32 %v362, %v395
        %v424 = vadd.f32 %v363, %v399
        %v425 = vadd.f32 %v364, %v403
        %v426 = vadd.f32 %v365, %v407
        %v427 = vadd.f32 %v366, %v411
        %v428 = vxor.u32 %v420, 2147483648
        %v429 = vxor.u32 %v421, 2147483648
        %v430 = vxor.u32 %v422, 2147483648
        %v431 = vxor.u32 %v423, 2147483648
        %v432 = vxor.u32 %v424, 2147483648
        %v433 = vxor.u32 %v425, 2147483648
        %v434 = vxor.u32 %v426, 2147483648
        %v435 = vxor.u32 %v427, 2147483648
        %v436 = vmul.f32 %v428, 1.442695
        %v437 = vpow.pop %v436
        %v438 = vmul.f32 %v429, 1.442695
        %v439 = vpow.pop %v438
        %v440 = vmul.f32 %v430, 1.442695
        %v441 = vpow.pop %v440
        %v442 = vmul.f32 %v431, 1.442695
        %v443 = vpow.pop %v442
        %v444 = vmul.f32 %v432, 1.442695
        %v445 = vpow.pop %v444
        %v446 = vmul.f32 %v433, 1.442695
        %v447 = vpow.pop %v446
        %v448 = vmul.f32 %v434, 1.442695
        %v449 = vpow.pop %v448
        %v450 = vmul.f32 %v435, 1.442695
        %v451 = vpow.pop %v450
        %v452 = vadd.f32 %v437, 1.0
        %v453 = vadd.f32 %v439, 1.0
        %v454 = vadd.f32 %v441, 1.0
        %v455 = vadd.f32 %v443, 1.0
        %v456 = vadd.f32 %v445, 1.0
        %v457 = vadd.f32 %v447, 1.0
        %v458 = vadd.f32 %v449, 1.0
        %v459 = vadd.f32 %v451, 1.0
        %v460 = vrcp.pop %v452
        %v461 = vmul.f32 1.0, %v460
        %v462 = vrcp.pop %v453
        %v463 = vmul.f32 1.0, %v462
        %v464 = vrcp.pop %v454
        %v465 = vmul.f32 1.0, %v464
        %v466 = vrcp.pop %v455
        %v467 = vmul.f32 1.0, %v466
        %v468 = vrcp.pop %v456
        %v469 = vmul.f32 1.0, %v468
        %v470 = vrcp.pop %v457
        %v471 = vmul.f32 1.0, %v470
        %v472 = vrcp.pop %v458
        %v473 = vmul.f32 1.0, %v472
        %v474 = vrcp.pop %v459
        %v475 = vmul.f32 1.0, %v474
        %477 = vset.pattern.permute.xlu0 0
        %478 = vperm.xlu0 %477, %v461
        %v479 = vpop.permute.xlu0 %478
        %482 = vset.pattern.permute.xlu0 0
        %483 = vperm.xlu0 %482, %v463
        %v484 = vpop.permute.xlu0 %483
        %487 = vset.pattern.permute.xlu0 0
        %488 = vperm.xlu0 %487, %v465
        %v489 = vpop.permute.xlu0 %488
        %492 = vset.pattern.permute.xlu0 0
        %493 = vperm.xlu0 %492, %v467
        %v494 = vpop.permute.xlu0 %493
        %497 = vset.pattern.permute.xlu0 0
        %498 = vperm.xlu0 %497, %v469
        %v499 = vpop.permute.xlu0 %498
        %502 = vset.pattern.permute.xlu0 0
        %503 = vperm.xlu0 %502, %v471
        %v504 = vpop.permute.xlu0 %503
        %507 = vset.pattern.permute.xlu0 0
        %508 = vperm.xlu0 %507, %v473
        %v509 = vpop.permute.xlu0 %508
        %512 = vset.pattern.permute.xlu0 0
        %513 = vperm.xlu0 %512, %v475
        %v514 = vpop.permute.xlu0 %513
        %v516 = vmul.f32 %v176, %v479
        %v517 = vmul.f32 %v177, %v479
        %v518 = vmul.f32 %v178, %v484
        %v519 = vmul.f32 %v179, %v484
        %v520 = vmul.f32 %v180, %v489
        %v521 = vmul.f32 %v181, %v489
        %v522 = vmul.f32 %v182, %v494
        %v523 = vmul.f32 %v183, %v494
        %v524 = vmul.f32 %v184, %v499
        %v525 = vmul.f32 %v185, %v499
        %v526 = vmul.f32 %v186, %v504
        %v527 = vmul.f32 %v187, %v504
        %v528 = vmul.f32 %v188, %v509
        %v529 = vmul.f32 %v189, %v509
        %v530 = vmul.f32 %v190, %v514
        %v531 = vmul.f32 %v191, %v514
        %532 = vst [vmem:[%s175] sm:$0xff] %v516
        %533 = vst [vmem:[%s175 + $0x8] sm:$0xff] %v517
        %534 = vst [vmem:[%s175 + $0x10] sm:$0xff] %v518
        %535 = vst [vmem:[%s175 + $0x18] sm:$0xff] %v519
        %536 = vst [vmem:[%s175 + $0x20] sm:$0xff] %v520
        %537 = vst [vmem:[%s175 + $0x28] sm:$0xff] %v521
        %538 = vst [vmem:[%s175 + $0x30] sm:$0xff] %v522
        %539 = vst [vmem:[%s175 + $0x38] sm:$0xff] %v523
        %540 = vst [vmem:[%s175 + $0x40] sm:$0xff] %v524
        %541 = vst [vmem:[%s175 + $0x48] sm:$0xff] %v525
        %542 = vst [vmem:[%s175 + $0x50] sm:$0xff] %v526
        %543 = vst [vmem:[%s175 + $0x58] sm:$0xff] %v527
        %544 = vst [vmem:[%s175 + $0x60] sm:$0xff] %v528
        %545 = vst [vmem:[%s175 + $0x68] sm:$0xff] %v529
        %546 = vst [vmem:[%s175 + $0x70] sm:$0xff] %v530
        %547 = vst [vmem:[%s175 + $0x78] sm:$0xff] %v531
        %s548 = sand.u32 %s75, 1
        %s549 = scalar_lea.sflag [#allocation4], %s548
        %s550 = sand.u32 %s75, 1
        %s551 = smul.addr %s550, 128
        %s552 = scalar_lea.vmem [#allocation7], %s551
        // Predicated region
        $region37: #{tpu_custom_call.1} parent=27 // pred_check
          %p553 = pneg %p85
        $region38: #{tpu_custom_call.1} parent=27 // pred_check_branch
          %555 = sbr.rel (%p553) target = $region40
        $region39: #{tpu_custom_call.1} parent=27 // pred_region
          %s557 = ssub.s32 2048, 2048
          %558 = vsyncadd %s549, %s557
          %s559 = smul.addr %s20, 16
          %s560 = smul.addr %s559, 128
          %s561 = scalar_lea.hbm %s2, %s560
          %s562 = sshll.u32 %s552, 4
          %s563 = int_to_ptr.vmem [resolvable:$true] %s562
          %568 = dma.vmem_to_hbm [thread:$0]  %s563, 2048, %s561, %s549, 256, 256, 16
        $region40: #{tpu_custom_call.1} parent=27 // pred_fallthru
          _
      $region28: #{tpu_custom_call.1} parent=5 // pred_fallthru
        _
      %p569 = scmp.le.s32.totalorder 2, %s15
      // Predicated region
      $region41: #{tpu_custom_call.1} parent=5 // pred_check
        %p570 = pneg %p569
      $region42: #{tpu_custom_call.1} parent=5 // pred_check_branch
        %572 = sbr.rel (%p570) target = $region44
      $region43: #{tpu_custom_call.1} parent=5 // pred_region
        %s573 = ssub.s32 %s15, 2
        // Predicated region
        $region45: #{tpu_custom_call.1} parent=43 // pred_check
          %p574 = pneg %p91
        $region46: #{tpu_custom_call.1} parent=43 // pred_check_branch
          %576 = sbr.rel (%p574) target = $region48
        $region47: #{tpu_custom_call.1} parent=43 // pred_region
          %s577 = sand.u32 %s76, 1
          %s578 = scalar_lea.sflag [#allocation4], %s577
          %s579 = sand.u32 %s76, 1
          %s580 = smul.addr %s579, 128
          %s581 = scalar_lea.vmem [#allocation7], %s580
          %582 = dma.done %s578, 2048
        $region48: #{tpu_custom_call.1} parent=43 // pred_fallthru
          _
      $region44: #{tpu_custom_call.1} parent=5 // pred_fallthru
        _
    $region6: #{tpu_custom_call.1} parent=1 // loop_footer
      %s19 = sadd.s32 1, %s15
    $region7: #{tpu_custom_call.1} parent=1 // loop_footer_branch
      %14 = sbr.rel target = $region3
    $region8: #{tpu_custom_call.1} parent=1 // loop_exit
      _
    %583 = vsyncpa [#allocation3], 1
    %s584 = scalar_lea.sflag [#allocation3], 1
    %585 = vsyncpa %s584, 1
    %586 = vsyncpa [#allocation4], 1
    %s587 = scalar_lea.sflag [#allocation4], 1
    %588 = vsyncpa %s587, 1
    %589 = vsyncpa [#allocation5], 1
    %s590 = scalar_lea.sflag [#allocation5], 1
    %591 = vsyncpa %s590, 1

</llo_original>
